<compile_context>
chip_gen: v5e
topology: v5e:2x2
jax: 0.10.0
libtpu: 0.0.40
codegen_flags: <defaults>
</compile_context>

<pallas_src>
import jax
import jax.numpy as jnp
from jax.experimental import pallas as pl
from jax.experimental.pallas import tpu as pltpu


def _gcn_kernel(x_ref, a1_ref, a2_ref, w_ref, b_ref, o_ref):
    # x_ref : (Nb, C, L*V)     compute dtype (bf16 or f32), lanes ordered (l, v)
    # a1_ref: (L*V, L*V)       kron(I_L, A)
    # a2_ref: (L*V, L*V)       kron(I_L, A @ A)
    # w_ref : (c_out, 3C)      fused 1x1-conv weight [W0 | W1 | W2]
    # b_ref : (c_out, 1)       f32 bias
    # o_ref : (Nb, c_out, L*V) f32
    nb, _, lv = x_ref.shape
    c_out = o_ref.shape[1]

    a1 = a1_ref[...]
    a2 = a2_ref[...]
    w = w_ref[...]
    # Hoisted bias broadcast (JAX does not CSE broadcast_in_dim inside loops).
    bias = jnp.broadcast_to(b_ref[...], (c_out, lv))

    # Static unroll over the (small) batch tile; every slice below is aligned.
    for n in range(nb):
        x0 = x_ref[n]                                               # (C, L*V)
        # Graph diffusion: two independent K=N=128 MXU-native dots (block-diagonal
        # adjacency), f32 accumulation.  No reshapes needed.
        x1 = jnp.dot(x0, a1, preferred_element_type=jnp.float32)    # (C, L*V) f32
        x2 = jnp.dot(x0, a2, preferred_element_type=jnp.float32)    # (C, L*V) f32
        # Fused 1x1 conv: stack the diffusion orders along sublanes and do a single
        # dot with K=3C (instead of three K=C dots + two full-width adds).
        h = jnp.concatenate([x0.astype(jnp.float32), x1, x2], axis=0)   # (3C, L*V)
        acc = jnp.dot(w, h.astype(w.dtype), preferred_element_type=jnp.float32)
        # TODO(synk): training-mode dropout (p>0) would use pltpu.prng_seed /
        # pltpu.prng_random_bits here; p=0.0 / eval mode is identity.
        o_ref[n] = (acc + bias).astype(o_ref.dtype)


def _pick_batch_tile(n, target=8):
    """Largest divisor of n that is <= target while keeping >= 2 grid steps
    (so v7x's two TensorCores both get work); on 1-TC chips this is simply
    overhead amortization."""
    best = 1
    for nb in range(1, min(n, target) + 1):
        if n % nb == 0 and (n == 1 or n // nb >= 2):
            best = nb
    return best


def gcn_forward(x, a, weight, bias, *, compute_dtype=jnp.bfloat16, batch_tile=None):
    """x: (N, C, V, L) f32, a: (V, V) f32, weight: (c_out, 3C) f32,
    bias: (c_out,) f32 -> (N, c_out, V, L) f32."""
    N, C, V, L = x.shape
    c_out, c_in_total = weight.shape
    assert c_in_total == 3 * C, "order=2, support_len=1 -> c_in = 3*C"
    LV = L * V

    nb = batch_tile if batch_tile is not None else _pick_batch_tile(N)
    assert N % nb == 0, (N, nb)
    grid = (N // nb,)

    # --- wrapper-side layout plumbing (outside the kernel) ---
    # (N, C, V, L) -> (N, C, L, V) -> (N, C, L*V): node axis innermost in lanes.
    x_t = jnp.transpose(x, (0, 1, 3, 2)).reshape(N, C, LV).astype(compute_dtype)
    # Block-diagonal adjacency: kron(I_L, A) and kron(I_L, A^2) (A^2 in f32 first,
    # then cast) -> diffusion is a full-K=128 matmul with zero in-kernel relayout.
    eye_l = jnp.eye(L, dtype=jnp.float32)
    a1_bd = jnp.kron(eye_l, a).astype(compute_dtype)
    a2_bd = jnp.kron(eye_l, jnp.dot(a, a)).astype(compute_dtype)
    w_fused = weight.astype(compute_dtype)                 # (c_out, 3C), single slab
    b_col = bias.reshape(c_out, 1).astype(jnp.float32)     # broadcast in-kernel

    out2d = pl.pallas_call(
        _gcn_kernel,
        out_shape=jax.ShapeDtypeStruct((N, c_out, LV), jnp.float32),
        grid_spec=pltpu.PrefetchScalarGridSpec(
            num_scalar_prefetch=0,
            grid=grid,
            in_specs=[
                # NOTE: if a profile ever shows the x DMA exposed, add
                # pipeline_mode=pl.Buffered(3) to this spec only.
                pl.BlockSpec((nb, C, LV), lambda i: (i, 0, 0)),
                pl.BlockSpec((LV, LV), lambda i: (0, 0)),
                pl.BlockSpec((LV, LV), lambda i: (0, 0)),
                pl.BlockSpec((c_out, 3 * C), lambda i: (0, 0)),
                pl.BlockSpec((c_out, 1), lambda i: (0, 0)),
            ],
            out_specs=pl.BlockSpec((nb, c_out, LV), lambda i: (i, 0, 0)),
        ),
        compiler_params=pltpu.CompilerParams(
            dimension_semantics=("parallel",),
            # Tiny blocks today; 32 MiB stays comfortably inside v7x's 64 MiB
            # physical VMEM as well as v5e/v6e's 128 MiB.
            vmem_limit_bytes=32 * 1024 * 1024,
        ),
    )(x_t, a1_bd, a2_bd, w_fused, b_col)

    # (N, c_out, L*V) with lanes ordered (l, v) -> (N, c_out, V, L)
    return jnp.transpose(out2d.reshape(N, c_out, L, V), (0, 1, 3, 2))


def gcn_reference(x, a, weight, bias):
    """Pure-JAX reference mirroring the PyTorch forward (f32 throughout)."""
    x1 = jnp.einsum('ncvl,vw->ncwl', x, a)
    x2 = jnp.einsum('ncvl,vw->ncwl', x1, a)
    h = jnp.concatenate([x, x1, x2], axis=1)
    out = jnp.einsum('oc,ncvl->novl', weight, h) + bias[None, :, None, None]
    return out


if __name__ == "__main__":
    # Small shapes consistent with the module: batch=2, c_in=4, nodes=16, seq=8
    N, C, V, L = 2, 4, 16, 8
    c_out = 8
    order, support_len = 2, 1
    c_in_total = (order * support_len + 1) * C   # 12

    key = jax.random.PRNGKey(0)
    kx, ka, kw, kb = jax.random.split(key, 4)

    x = jax.random.normal(kx, (N, C, V, L), dtype=jnp.float32)
    a = jax.random.uniform(ka, (V, V), dtype=jnp.float32)
    a = a / jnp.sum(a, axis=1, keepdims=True)    # row-normalized adjacency

    # deterministic 1x1-conv parameters (PyTorch weight (c_out, 3C, 1, 1) squeezed)
    weight = 0.1 * jax.random.normal(kw, (c_out, c_in_total), dtype=jnp.float32)
    bias = 0.1 * jax.random.normal(kb, (c_out,), dtype=jnp.float32)

    ref = gcn_reference(x, a, weight, bias)

    # f32-operand path: validates exact semantics against the reference.
    out_f32 = gcn_forward(x, a, weight, bias, compute_dtype=jnp.float32)
    out_f32 = jax.block_until_ready(out_f32)
    assert out_f32.shape == (N, c_out, V, L), out_f32.shape
    assert jnp.allclose(out_f32, ref, atol=1e-4, rtol=1e-4), (
        float(jnp.max(jnp.abs(out_f32 - ref))))

    # bf16-operand path (MXU-native fast path): loose tolerance for bf16 rounding.
    out_bf16 = gcn_forward(x, a, weight, bias, compute_dtype=jnp.bfloat16)
    out_bf16 = jax.block_until_ready(out_bf16)
    assert out_bf16.shape == (N, c_out, V, L), out_bf16.shape
    assert jnp.allclose(out_bf16, ref, atol=5e-2, rtol=5e-2), (
        float(jnp.max(jnp.abs(out_bf16 - ref))))

    print("KERNEL_OK")
</pallas_src>

<mosaic_0001>
module attributes {stable_mosaic.version = 11 : i64} {
  func.func @_gcn_kernel(%arg0: i32, %arg1: memref<1x4x128xf32, #tpu.memory_space<vmem>>, %arg2: memref<128x128xf32, #tpu.memory_space<vmem>>, %arg3: memref<128x128xf32, #tpu.memory_space<vmem>>, %arg4: memref<8x12xf32, #tpu.memory_space<vmem>>, %arg5: memref<8x1xf32, #tpu.memory_space<vmem>>, %arg6: memref<1x8x128xf32, #tpu.memory_space<vmem>>) attributes {dimension_semantics = [#tpu.dimension_semantics<parallel>], iteration_bounds = array<i64: 2>, scalar_prefetch = 0 : i64, scratch_operands = 0 : i64, tpu.core_type = #tpu.core_type<tc>, window_params = [{transform_indices = @transform_0, window_bounds = array<i64: 1, 4, 128>}, {pipeline_mode = #tpu.pipeline_mode<synchronous>, transform_indices = @transform_1, window_bounds = array<i64: 128, 128>}, {pipeline_mode = #tpu.pipeline_mode<synchronous>, transform_indices = @transform_2, window_bounds = array<i64: 128, 128>}, {pipeline_mode = #tpu.pipeline_mode<synchronous>, transform_indices = @transform_3, window_bounds = array<i64: 8, 12>}, {pipeline_mode = #tpu.pipeline_mode<synchronous>, transform_indices = @transform_4, window_bounds = array<i64: 8, 1>}, {transform_indices = @transform_5, window_bounds = array<i64: 1, 8, 128>}]} {
    %c0 = arith.constant 0 : index
    %c0_0 = arith.constant 0 : index
    %0 = vector.load %arg2[%c0, %c0_0] : memref<128x128xf32, #tpu.memory_space<vmem>>, vector<128x128xf32>
    %c0_1 = arith.constant 0 : index
    %c0_2 = arith.constant 0 : index
    %1 = vector.load %arg3[%c0_1, %c0_2] : memref<128x128xf32, #tpu.memory_space<vmem>>, vector<128x128xf32>
    %c0_3 = arith.constant 0 : index
    %c0_4 = arith.constant 0 : index
    %2 = vector.load %arg4[%c0_3, %c0_4] : memref<8x12xf32, #tpu.memory_space<vmem>>, vector<8x12xf32>
    %c0_5 = arith.constant 0 : index
    %c0_6 = arith.constant 0 : index
    %3 = vector.load %arg5[%c0_5, %c0_6] : memref<8x1xf32, #tpu.memory_space<vmem>>, vector<8x1xf32>
    %4 = vector.shape_cast %3 : vector<8x1xf32> to vector<8x1xf32>
    %5 = vector.broadcast %4 : vector<8x1xf32> to vector<8x128xf32>
    %c0_7 = arith.constant 0 : index
    %c0_8 = arith.constant 0 : index
    %c0_9 = arith.constant 0 : index
    %6 = vector.load %arg1[%c0_7, %c0_8, %c0_9] : memref<1x4x128xf32, #tpu.memory_space<vmem>>, vector<1x4x128xf32>
    %7 = vector.shape_cast %6 : vector<1x4x128xf32> to vector<4x128xf32>
    %cst = arith.constant dense<0.000000e+00> : vector<4x128xf32>
    %8 = tpu.matmul %7, %0, %cst {dimension_numbers = #tpu.dot_dimension_numbers<[1], [0], [0], [1], [0, 0, 1, 1], [], []>} : vector<4x128xf32>, vector<128x128xf32>, vector<4x128xf32> -> vector<4x128xf32>
    %cst_10 = arith.constant dense<0.000000e+00> : vector<4x128xf32>
    %9 = tpu.matmul %7, %1, %cst_10 {dimension_numbers = #tpu.dot_dimension_numbers<[1], [0], [0], [1], [0, 0, 1, 1], [], []>} : vector<4x128xf32>, vector<128x128xf32>, vector<4x128xf32> -> vector<4x128xf32>
    %10 = tpu.concatenate %7, %8, %9 in 0 : vector<4x128xf32>, vector<4x128xf32>, vector<4x128xf32> -> vector<12x128xf32>
    %cst_11 = arith.constant dense<0.000000e+00> : vector<8x128xf32>
    %11 = tpu.matmul %2, %10, %cst_11 {dimension_numbers = #tpu.dot_dimension_numbers<[1], [0], [0], [1], [0, 0, 1, 1], [], []>} : vector<8x12xf32>, vector<12x128xf32>, vector<8x128xf32> -> vector<8x128xf32>
    %12 = arith.addf %11, %5 : vector<8x128xf32>
    %c0_12 = arith.constant 0 : index
    %c0_13 = arith.constant 0 : index
    %c0_14 = arith.constant 0 : index
    %13 = vector.load %arg6[%c0_12, %c0_13, %c0_14] : memref<1x8x128xf32, #tpu.memory_space<vmem>>, vector<1x8x128xf32>
    %14 = vector.shape_cast %13 : vector<1x8x128xf32> to vector<8x128xf32>
    %15 = vector.shape_cast %12 : vector<8x128xf32> to vector<1x8x128xf32>
    tpu.vector_store %arg6[%c0_12, %c0_13, %c0_14], %15 {strides = array<i32>} : memref<1x8x128xf32, #tpu.memory_space<vmem>>, vector<1x8x128xf32>,
    return
  }
  func.func @transform_0(%arg0: i32) -> (i32, i32, i32) {
    %c0_i32 = arith.constant 0 : i32
    %c0_i32_0 = arith.constant 0 : i32
    %c0_i32_1 = arith.constant 0 : i32
    return %arg0, %c0_i32, %c0_i32_0 : i32, i32, i32
  }
  func.func @transform_1(%arg0: i32) -> (i32, i32) {
    %c0_i32 = arith.constant 0 : i32
    %c0_i32_0 = arith.constant 0 : i32
    %c0_i32_1 = arith.constant 0 : i32
    return %c0_i32, %c0_i32_0 : i32, i32
  }
  func.func @transform_2(%arg0: i32) -> (i32, i32) {
    %c0_i32 = arith.constant 0 : i32
    %c0_i32_0 = arith.constant 0 : i32
    %c0_i32_1 = arith.constant 0 : i32
    return %c0_i32, %c0_i32_0 : i32, i32
  }
  func.func @transform_3(%arg0: i32) -> (i32, i32) {
    %c0_i32 = arith.constant 0 : i32
    %c0_i32_0 = arith.constant 0 : i32
    %c0_i32_1 = arith.constant 0 : i32
    return %c0_i32, %c0_i32_0 : i32, i32
  }
  func.func @transform_4(%arg0: i32) -> (i32, i32) {
    %c0_i32 = arith.constant 0 : i32
    %c0_i32_0 = arith.constant 0 : i32
    %c0_i32_1 = arith.constant 0 : i32
    return %c0_i32, %c0_i32_0 : i32, i32
  }
  func.func @transform_5(%arg0: i32) -> (i32, i32, i32) {
    %c0_i32 = arith.constant 0 : i32
    %c0_i32_0 = arith.constant 0 : i32
    %c0_i32_1 = arith.constant 0 : i32
    return %arg0, %c0_i32, %c0_i32_0 : i32, i32, i32
  }
}

</mosaic_0001>

<llo_original>
// kernel: tpu_custom_call.1
$region0: #{tpu_custom_call.1}
  #allocation0 [shape = 'u32[]', space=smem, size = 0x4, offset = 0x4, fixed_abs, tag = 'smem constant byte address 0x4 - core index']
  #allocation1 [shape = 'u32[72,128]{1,0:T(1,128)}', space=vmem, size = 0x9000, scoped, tag = 'internal scratch']
  %s0 = inlined_call_operand.vmem [shape: f32[2,4,128], index: 0, kind: input, shape index: {}]
  %s1 = inlined_call_operand.hbm [shape: f32[128,128], index: 1, kind: input, shape index: {}]
  %s2 = inlined_call_operand.hbm [shape: f32[128,128], index: 2, kind: input, shape index: {}]
  %s3 = inlined_call_operand.hbm [shape: f32[8,12], index: 3, kind: input, shape index: {}]
  %s4 = inlined_call_operand.vmem [shape: f32[8,1], index: 4, kind: input, shape index: {}]
  %s5 = inlined_call_operand.hbm [shape: f32[2,8,128], index: 5, kind: output, shape index: {}]
  %s6 = sld [smem:[#allocation0]]
  $region65: #{tpu_custom_call.1} parent=0
    _
  %s8 = ssub.s32 1, %s6
  %s9 = scalar_select 0, %s8, %s6
  $region1: #{tpu_custom_call.1} parent=0
    #allocation2 [shape = 'u8[65536]{0}', space=vmem, size = 0x10000, scoped, tag = 'input window, operand 1, single buffered']
    #allocation3 [shape = 's32[2]{0}', space=sflag, size = 0x8, scoped, tag = 'scoped memory for tpu_custom_call.1']
    #allocation4 [shape = 's32[2]{0}', space=sflag, size = 0x8, scoped, tag = 'scoped memory for tpu_custom_call.1']
    #allocation5 [shape = 'u8[65536]{0}', space=vmem, size = 0x10000, scoped, tag = 'input window, operand 2, single buffered']
    #allocation6 [shape = 's32[1]{0}', space=sflag, size = 0x4, scoped, tag = 'scoped memory for tpu_custom_call.1']
    #allocation7 [shape = 'u8[4096]{0}', space=vmem, size = 0x1000, scoped, tag = 'input window, operand 3, single buffered']
    #allocation8 [shape = 'u8[8192]{0}', space=vmem, size = 0x2000, scoped, tag = 'output window, operand 0']
    %10 = vsyncpa [#allocation3], 0
    %11 = vsyncpa [#allocation6], 0
    %12 = vsyncpa [#allocation4], 0
    %s13 = scalar_lea.sflag [#allocation4], 1
    %14 = vsyncpa %s13, 0
    loop: start=0, step=1, limit=4
    $region2: #{tpu_custom_call.1} parent=1 // loop_pre_header
      _
    $region3: #{tpu_custom_call.1} parent=1 // loop_header
      %s16 = sphi 0, %s20
      %p17 = scmp.ge.s32.totalorder %s16, 4
      %s26 = sphi 0, %s28
      %s29 = sphi 0, %s26
      %s30 = sphi 0, %s29
      %s46 = sphi 0, %s30
      %s50 = sphi 0, %s50
      %s52 = sphi 0, %s50
      %s53 = sphi 0, %s52
      %s67 = sphi 0, %s53
      %s71 = sphi 0, %s71
      %s73 = sphi 0, %s71
      %s74 = sphi 0, %s73
      %s88 = sphi 0, %s74
      %s92 = sphi 0, %s92
      %s94 = sphi 0, %s92
      %s95 = sphi 0, %s94
      %s109 = sphi 0, %s95
      %s113 = sphi 0, %s113
      %s115 = sphi 0, %s113
      %s116 = sphi 0, %s115
      %s130 = sphi 0, %s116
      %s136 = sphi 0, %s138
      %s139 = sphi 0, %s136
      %s140 = sphi 0, %s139
      %s156 = sphi 0, %s140
    $region4: #{tpu_custom_call.1} parent=1 // loop_header_branch
      %19 = sbr.rel (%p17) target = $region8
    $region5: #{tpu_custom_call.1} parent=1 // loop_body
      %s21 = ssub.s32 %s16, 1
      %s22 = ssub.s32 %s16, 2
      %s23 = sadd.s32 %s16, 1
      %s24 = ssub.s32 %s16, %s23
      %p25 = scmp.eq.s32.totalorder %s24, 0
      %s27 = sadd.s32 %s26, 1
      %s28 = scalar_select %p25, %s26, %s27
      %p31 = pneg %p25
      %p32 = scmp.eq.s32.totalorder %s16, 1
      %p33 = por %p31, %p32
      %p34 = scmp.ne.s32.totalorder %s26, %s29
      %p35 = scmp.eq.s32.totalorder %s16, 0
      %p36 = por %p34, %p35
      %p37 = scmp.ne.s32.totalorder %s26, %s29
      %p38 = scmp.eq.s32.totalorder %s21, 1
      %p39 = por %p37, %p38
      %p40 = scmp.ne.s32.totalorder %s29, %s30
      %p41 = scmp.eq.s32.totalorder %s21, 0
      %p42 = por %p40, %p41
      %p43 = scmp.ne.s32.totalorder %s29, %s30
      %p44 = scmp.eq.s32.totalorder %s22, 1
      %p45 = por %p43, %p44
      %p47 = scmp.ne.s32.totalorder %s30, %s46
      %p48 = scmp.eq.s32.totalorder %s22, 0
      %p49 = por %p47, %p48
      %s51 = sadd.s32 %s50, 1
      %p54 = scmp.eq.s32.totalorder %s16, 1
      %p55 = scmp.ne.s32.totalorder %s50, %s52
      %p56 = scmp.eq.s32.totalorder %s16, 0
      %p57 = por %p55, %p56
      %p58 = scmp.ne.s32.totalorder %s50, %s52
      %p59 = scmp.eq.s32.totalorder %s21, 1
      %p60 = por %p58, %p59
      %p61 = scmp.ne.s32.totalorder %s52, %s53
      %p62 = scmp.eq.s32.totalorder %s21, 0
      %p63 = por %p61, %p62
      %p64 = scmp.ne.s32.totalorder %s52, %s53
      %p65 = scmp.eq.s32.totalorder %s22, 1
      %p66 = por %p64, %p65
      %p68 = scmp.ne.s32.totalorder %s53, %s67
      %p69 = scmp.eq.s32.totalorder %s22, 0
      %p70 = por %p68, %p69
      %s72 = sadd.s32 %s71, 1
      %p75 = scmp.eq.s32.totalorder %s16, 1
      %p76 = scmp.ne.s32.totalorder %s71, %s73
      %p77 = scmp.eq.s32.totalorder %s16, 0
      %p78 = por %p76, %p77
      %p79 = scmp.ne.s32.totalorder %s71, %s73
      %p80 = scmp.eq.s32.totalorder %s21, 1
      %p81 = por %p79, %p80
      %p82 = scmp.ne.s32.totalorder %s73, %s74
      %p83 = scmp.eq.s32.totalorder %s21, 0
      %p84 = por %p82, %p83
      %p85 = scmp.ne.s32.totalorder %s73, %s74
      %p86 = scmp.eq.s32.totalorder %s22, 1
      %p87 = por %p85, %p86
      %p89 = scmp.ne.s32.totalorder %s74, %s88
      %p90 = scmp.eq.s32.totalorder %s22, 0
      %p91 = por %p89, %p90
      %s93 = sadd.s32 %s92, 1
      %p96 = scmp.eq.s32.totalorder %s16, 1
      %p97 = scmp.ne.s32.totalorder %s92, %s94
      %p98 = scmp.eq.s32.totalorder %s16, 0
      %p99 = por %p97, %p98
      %p100 = scmp.ne.s32.totalorder %s92, %s94
      %p101 = scmp.eq.s32.totalorder %s21, 1
      %p102 = por %p100, %p101
      %p103 = scmp.ne.s32.totalorder %s94, %s95
      %p104 = scmp.eq.s32.totalorder %s21, 0
      %p105 = por %p103, %p104
      %p106 = scmp.ne.s32.totalorder %s94, %s95
      %p107 = scmp.eq.s32.totalorder %s22, 1
      %p108 = por %p106, %p107
      %p110 = scmp.ne.s32.totalorder %s95, %s109
      %p111 = scmp.eq.s32.totalorder %s22, 0
      %p112 = por %p110, %p111
      %s114 = sadd.s32 %s113, 1
      %p117 = scmp.eq.s32.totalorder %s16, 1
      %p118 = scmp.ne.s32.totalorder %s113, %s115
      %p119 = scmp.eq.s32.totalorder %s16, 0
      %p120 = por %p118, %p119
      %p121 = scmp.ne.s32.totalorder %s113, %s115
      %p122 = scmp.eq.s32.totalorder %s21, 1
      %p123 = por %p121, %p122
      %p124 = scmp.ne.s32.totalorder %s115, %s116
      %p125 = scmp.eq.s32.totalorder %s21, 0
      %p126 = por %p124, %p125
      %p127 = scmp.ne.s32.totalorder %s115, %s116
      %p128 = scmp.eq.s32.totalorder %s22, 1
      %p129 = por %p127, %p128
      %p131 = scmp.ne.s32.totalorder %s116, %s130
      %p132 = scmp.eq.s32.totalorder %s22, 0
      %p133 = por %p131, %p132
      %s134 = ssub.s32 %s16, %s23
      %p135 = scmp.eq.s32.totalorder %s134, 0
      %s137 = sadd.s32 %s136, 1
      %s138 = scalar_select %p135, %s136, %s137
      %p141 = pneg %p135
      %p142 = scmp.eq.s32.totalorder %s16, 1
      %p143 = por %p141, %p142
      %p144 = scmp.ne.s32.totalorder %s136, %s139
      %p145 = scmp.eq.s32.totalorder %s16, 0
      %p146 = por %p144, %p145
      %p147 = scmp.ne.s32.totalorder %s136, %s139
      %p148 = scmp.eq.s32.totalorder %s21, 1
      %p149 = por %p147, %p148
      %p150 = scmp.ne.s32.totalorder %s139, %s140
      %p151 = scmp.eq.s32.totalorder %s21, 0
      %p152 = por %p150, %p151
      %p153 = scmp.ne.s32.totalorder %s139, %s140
      %p154 = scmp.eq.s32.totalorder %s22, 1
      %p155 = por %p153, %p154
      %p157 = scmp.ne.s32.totalorder %s140, %s156
      %p158 = scmp.eq.s32.totalorder %s22, 0
      %p159 = por %p157, %p158
      %p160 = scmp.le.s32.totalorder 1, %s16
      %p161 = scmp.lt.s32.totalorder %s16, 3
      %p162 = pnand %p160, %p161
      %p163 = pneg %p162
      // Predicated region
      $region9: #{tpu_custom_call.1} parent=5 // pred_check
        _
      $region10: #{tpu_custom_call.1} parent=5 // pred_check_branch
        %165 = sbr.rel (%p162) target = $region12
      $region11: #{tpu_custom_call.1} parent=5 // pred_region
        %s166 = ssub.s32 %s16, 1
        // Predicated region
        $region13: #{tpu_custom_call.1} parent=11 // pred_check
          %p167 = pneg %p63
        $region14: #{tpu_custom_call.1} parent=11 // pred_check_branch
          %169 = sbr.rel (%p167) target = $region16
        $region15: #{tpu_custom_call.1} parent=11 // pred_region
          %171 = vsyncadd [#allocation3], 0
          %s172 = sshll.u32 %s1, 4
          %s173 = int_to_ptr.hbm [resolvable:$true] %s172
          %s174 = sshll.u32 [#allocation2], 4
          %s175 = int_to_ptr.vmem [resolvable:$true] %s174
          %180 = dma.hbm_to_vmem [thread:$0]  %s173, 2048, %s175, [#allocation3], 128, 128, 8
        $region16: #{tpu_custom_call.1} parent=11 // pred_fallthru
          _
        // Predicated region
        $region17: #{tpu_custom_call.1} parent=11 // pred_check
          %p181 = pneg %p84
        $region18: #{tpu_custom_call.1} parent=11 // pred_check_branch
          %183 = sbr.rel (%p181) target = $region20
        $region19: #{tpu_custom_call.1} parent=11 // pred_region
          %185 = vsyncadd [#allocation6], 0
          %s186 = sshll.u32 %s2, 4
          %s187 = int_to_ptr.hbm [resolvable:$true] %s186
          %s188 = sshll.u32 [#allocation5], 4
          %s189 = int_to_ptr.vmem [resolvable:$true] %s188
          %194 = dma.hbm_to_vmem [thread:$0]  %s187, 2048, %s189, [#allocation6], 128, 128, 8
        $region20: #{tpu_custom_call.1} parent=11 // pred_fallthru
          _
        // Predicated region
        $region21: #{tpu_custom_call.1} parent=11 // pred_check
          %p195 = pneg %p105
        $region22: #{tpu_custom_call.1} parent=11 // pred_check_branch
          %197 = sbr.rel (%p195) target = $region24
        $region23: #{tpu_custom_call.1} parent=11 // pred_region
          %199 = vsyncadd [#allocation6], 0
          %s201 = sshll.u32 %s3, 4
          %s202 = int_to_ptr.hbm [resolvable:$true] %s201
          %s203 = sshll.u32 [#allocation7], 4
          %s204 = int_to_ptr.vmem [resolvable:$true] %s203
          %206 = dma.hbm_to_vmem [thread:$0]  %s202, 128, %s204, [#allocation6]
        $region24: #{tpu_custom_call.1} parent=11 // pred_fallthru
          _
        // Predicated region
        $region25: #{tpu_custom_call.1} parent=11 // pred_check
          %p207 = pneg %p126
        $region26: #{tpu_custom_call.1} parent=11 // pred_check_branch
          %209 = sbr.rel (%p207) target = $region28
        $region27: #{tpu_custom_call.1} parent=11 // pred_region
          _
        $region28: #{tpu_custom_call.1} parent=11 // pred_fallthru
          _
      $region12: #{tpu_custom_call.1} parent=5 // pred_fallthru
        _
      %p210 = scmp.lt.s32.totalorder %s16, 2
      // Predicated region
      $region29: #{tpu_custom_call.1} parent=5 // pred_check
        %p211 = pneg %p210
      $region30: #{tpu_custom_call.1} parent=5 // pred_check_branch
        %213 = sbr.rel (%p211) target = $region32
      $region31: #{tpu_custom_call.1} parent=5 // pred_region
        // Predicated region
        $region33: #{tpu_custom_call.1} parent=31 // pred_check
          %p214 = pneg %p36
        $region34: #{tpu_custom_call.1} parent=31 // pred_check_branch
          %216 = sbr.rel (%p214) target = $region36
        $region35: #{tpu_custom_call.1} parent=31 // pred_region
          %p217 = scmp.lt.s32.totalorder %s16, 1
          %s218 = scalar_select %p217, %s16, 1
          %s219 = smul.addr %s218, 4
          %s220 = scalar_lea.vmem %s0, %s219
        $region36: #{tpu_custom_call.1} parent=31 // pred_fallthru
          _
      $region32: #{tpu_custom_call.1} parent=5 // pred_fallthru
        _
      %p221 = scmp.le.s32.totalorder 1, %s16
      %p222 = scmp.lt.s32.totalorder %s16, 3
      %p223 = pnand %p221, %p222
      %p224 = pneg %p223
      // Predicated region
      $region37: #{tpu_custom_call.1} parent=5 // pred_check
        _
      $region38: #{tpu_custom_call.1} parent=5 // pred_check_branch
        %226 = sbr.rel (%p223) target = $region40
      $region39: #{tpu_custom_call.1} parent=5 // pred_region
        %s227 = ssub.s32 %s16, 1
        // Predicated region
        $region41: #{tpu_custom_call.1} parent=39 // pred_check
          %p228 = pneg %p63
        $region42: #{tpu_custom_call.1} parent=39 // pred_check_branch
          %230 = sbr.rel (%p228) target = $region44
        $region43: #{tpu_custom_call.1} parent=39 // pred_region
          %232 = dma.done [#allocation3], 2048
        $region44: #{tpu_custom_call.1} parent=39 // pred_fallthru
          _
        // Predicated region
        $region45: #{tpu_custom_call.1} parent=39 // pred_check
          %p233 = pneg %p84
        $region46: #{tpu_custom_call.1} parent=39 // pred_check_branch
          %235 = sbr.rel (%p233) target = $region48
        $region47: #{tpu_custom_call.1} parent=39 // pred_region
          %237 = dma.done [#allocation6], 2048
        $region48: #{tpu_custom_call.1} parent=39 // pred_fallthru
          _
        // Predicated region
        $region49: #{tpu_custom_call.1} parent=39 // pred_check
          %p238 = pneg %p105
        $region50: #{tpu_custom_call.1} parent=39 // pred_check_branch
          %240 = sbr.rel (%p238) target = $region52
        $region51: #{tpu_custom_call.1} parent=39 // pred_region
          %242 = dma.done [#allocation6], 128
        $region52: #{tpu_custom_call.1} parent=39 // pred_fallthru
          _
        %p243 = scmp.lt.s32.totalorder %s21, 1
        %s244 = scalar_select %p243, %s21, 1
        %s245 = smul.addr %s244, 4
        %s246 = scalar_lea.vmem %s0, %s245
        %p247 = pneg %p42
        %p248 = pneg %p39
        %p249 = pneg %p63
        %p250 = pneg %p60
        %p251 = pneg %p84
        %p252 = pneg %p81
        %p253 = pneg %p105
        %p254 = pneg %p102
        %p255 = pneg %p126
        %p256 = pneg %p123
        %p257 = pneg %p152
        %p258 = pneg %p149
        %s259 = sand.u32 %s139, 1
        %s260 = scalar_lea.sflag [#allocation4], %s259
        %s261 = sand.u32 %s139, 1
        %s262 = smul.addr %s261, 8
        %s263 = scalar_lea.vmem [#allocation8], %s262
        %p264 = scmp.lt.s32.totalorder %s21, 1
        %s265 = scalar_select %p264, %s21, 1
        %s266 = smul.addr %s265, 4
        %s267 = scalar_lea.vmem %s0, %s266
        %v268 = vld [vmem:[#allocation2] sm:$0xff]
        %v269 = vld [vmem:[#allocation2 + $0x8] sm:$0xff]
        %v270 = vld [vmem:[#allocation2 + $0x10] sm:$0xff]
        %v271 = vld [vmem:[#allocation2 + $0x18] sm:$0xff]
        %v272 = vld [vmem:[#allocation2 + $0x20] sm:$0xff]
        %v273 = vld [vmem:[#allocation2 + $0x28] sm:$0xff]
        %v274 = vld [vmem:[#allocation2 + $0x30] sm:$0xff]
        %v275 = vld [vmem:[#allocation2 + $0x38] sm:$0xff]
        %v276 = vld [vmem:[#allocation2 + $0x40] sm:$0xff]
        %v277 = vld [vmem:[#allocation2 + $0x48] sm:$0xff]
        %v278 = vld [vmem:[#allocation2 + $0x50] sm:$0xff]
        %v279 = vld [vmem:[#allocation2 + $0x58] sm:$0xff]
        %v280 = vld [vmem:[#allocation2 + $0x60] sm:$0xff]
        %v281 = vld [vmem:[#allocation2 + $0x68] sm:$0xff]
        %v282 = vld [vmem:[#allocation2 + $0x70] sm:$0xff]
        %v283 = vld [vmem:[#allocation2 + $0x78] sm:$0xff]
        %v284 = vld [vmem:[#allocation5] sm:$0xff]
        %v285 = vld [vmem:[#allocation5 + $0x8] sm:$0xff]
        %v286 = vld [vmem:[#allocation5 + $0x10] sm:$0xff]
        %v287 = vld [vmem:[#allocation5 + $0x18] sm:$0xff]
        %v288 = vld [vmem:[#allocation5 + $0x20] sm:$0xff]
        %v289 = vld [vmem:[#allocation5 + $0x28] sm:$0xff]
        %v290 = vld [vmem:[#allocation5 + $0x30] sm:$0xff]
        %v291 = vld [vmem:[#allocation5 + $0x38] sm:$0xff]
        %v292 = vld [vmem:[#allocation5 + $0x40] sm:$0xff]
        %v293 = vld [vmem:[#allocation5 + $0x48] sm:$0xff]
        %v294 = vld [vmem:[#allocation5 + $0x50] sm:$0xff]
        %v295 = vld [vmem:[#allocation5 + $0x58] sm:$0xff]
        %v296 = vld [vmem:[#allocation5 + $0x60] sm:$0xff]
        %v297 = vld [vmem:[#allocation5 + $0x68] sm:$0xff]
        %v298 = vld [vmem:[#allocation5 + $0x70] sm:$0xff]
        %v299 = vld [vmem:[#allocation5 + $0x78] sm:$0xff]
        %v300 = vld [vmem:[#allocation7] sm:$0xff]
        %v301 = vld [vmem:[%s4] sm:$0xff]
        %303 = vset.pattern.permute.xlu0 0
        %304 = vperm.xlu0 %303, %v301
        %v305 = vpop.permute.xlu0 %304
        %v307 = vld [vmem:[%s267] sm:$0xf]
        %308 = vmatpush.msra.mxu0 %v283
        %309 = vmatpush.msra.mxu0 %v282
        %310 = vmatpush.msra.mxu0 %v281
        %311 = vmatpush.msra.mxu0 %v280
        %312 = vmatpush.msra.mxu0 %v279
        %313 = vmatpush.msra.mxu0 %v278
        %314 = vmatpush.msra.mxu0 %v277
        %315 = vmatpush.msra.mxu0 %v276
        %316 = vmatpush.msra.mxu0 %v275
        %317 = vmatpush.msra.mxu0 %v274
        %318 = vmatpush.msra.mxu0 %v273
        %319 = vmatpush.msra.mxu0 %v272
        %320 = vmatpush.msra.mxu0 %v271
        %321 = vmatpush.msra.mxu0 %v270
        %322 = vmatpush.msra.mxu0 %v269
        %323 = vmatpush.msra.mxu0 %v268
        %324 = vmatmul.f32.gmra.mxu0 %v307
        %v325 = vpop.f32.mrf.mxu0
        %v326 = vadd.f32 0.0, %v325
        %327 = vdwg.mxu0
        %328 = vmatpush.msra.mxu0 %v299
        %329 = vmatpush.msra.mxu0 %v298
        %330 = vmatpush.msra.mxu0 %v297
        %331 = vmatpush.msra.mxu0 %v296
        %332 = vmatpush.msra.mxu0 %v295
        %333 = vmatpush.msra.mxu0 %v294
        %334 = vmatpush.msra.mxu0 %v293
        %335 = vmatpush.msra.mxu0 %v292
        %336 = vmatpush.msra.mxu0 %v291
        %337 = vmatpush.msra.mxu0 %v290
        %338 = vmatpush.msra.mxu0 %v289
        %339 = vmatpush.msra.mxu0 %v288
        %340 = vmatpush.msra.mxu0 %v287
        %341 = vmatpush.msra.mxu0 %v286
        %342 = vmatpush.msra.mxu0 %v285
        %343 = vmatpush.msra.mxu0 %v284
        %344 = vmatmul.f32.gmra.mxu0 %v307
        %v345 = vpop.f32.mrf.mxu0
        %v346 = vadd.f32 0.0, %v345
        %347 = vdwg.mxu0
        %v349 = vrot.slane %v326, 4
        %vm351 = vcmask 1043456
        %v352 = vsel %vm351, %v307, %v349
        %vm353 = vcmask 97280
        %v355 = vsel %vm353, %v300, 0
        %v358 = vsel %vm351, %v346, 0
        %360 = vmatpush.msra.mxu0 0.0
        %361 = vmatpush.msra.mxu0 0.0
        %362 = vmatpush.msra.mxu0 0.0
        %363 = vmatpush.msra.mxu0 0.0
        %364 = vmatpush.msra.mxu0 0.0
        %365 = vmatpush.msra.mxu0 0.0
        %366 = vmatpush.msra.mxu0 0.0
        %367 = vmatpush.msra.mxu0 0.0
        %368 = vmatpush.msra.mxu0 0.0
        %369 = vmatpush.msra.mxu0 0.0
        %370 = vmatpush.msra.mxu0 0.0
        %371 = vmatpush.msra.mxu0 0.0
        %372 = vmatpush.msra.mxu0 0.0
        %373 = vmatpush.msra.mxu0 0.0
        %374 = vmatpush.msra.mxu0 %v358
        %375 = vmatpush.msra.mxu0 %v352
        %376 = vmatmul.f32.gmra.mxu0 %v355
        %v377 = vpop.f32.mrf.mxu0
        %v378 = vadd.f32 %v305, %v377
        %379 = vdwg.mxu0
        %380 = vst [vmem:[%s263] sm:$0xff] %v378
        %s381 = sand.u32 %s139, 1
        %s382 = scalar_lea.sflag [#allocation4], %s381
        %s383 = sand.u32 %s139, 1
        %s384 = smul.addr %s383, 8
        %s385 = scalar_lea.vmem [#allocation8], %s384
        // Predicated region
        $region53: #{tpu_custom_call.1} parent=39 // pred_check
          %p386 = pneg %p149
        $region54: #{tpu_custom_call.1} parent=39 // pred_check_branch
          %388 = sbr.rel (%p386) target = $region56
        $region55: #{tpu_custom_call.1} parent=39 // pred_region
          %390 = vsyncadd %s382, 0
          %s391 = smul.addr %s21, 8
          %s392 = scalar_lea.hbm %s5, %s391
          %s394 = sshll.u32 %s385, 4
          %s395 = int_to_ptr.vmem [resolvable:$true] %s394
          %s396 = sshll.u32 %s392, 4
          %s397 = int_to_ptr.hbm [resolvable:$true] %s396
          %399 = dma.vmem_to_hbm [thread:$0]  %s395, 128, %s397, %s382
        $region56: #{tpu_custom_call.1} parent=39 // pred_fallthru
          _
      $region40: #{tpu_custom_call.1} parent=5 // pred_fallthru
        _
      %p400 = scmp.le.s32.totalorder 2, %s16
      // Predicated region
      $region57: #{tpu_custom_call.1} parent=5 // pred_check
        %p401 = pneg %p400
      $region58: #{tpu_custom_call.1} parent=5 // pred_check_branch
        %403 = sbr.rel (%p401) target = $region60
      $region59: #{tpu_custom_call.1} parent=5 // pred_region
        %s404 = ssub.s32 %s16, 2
        // Predicated region
        $region61: #{tpu_custom_call.1} parent=59 // pred_check
          %p405 = pneg %p155
        $region62: #{tpu_custom_call.1} parent=59 // pred_check_branch
          %407 = sbr.rel (%p405) target = $region64
        $region63: #{tpu_custom_call.1} parent=59 // pred_region
          %s408 = sand.u32 %s140, 1
          %s409 = scalar_lea.sflag [#allocation4], %s408
          %s410 = sand.u32 %s140, 1
          %s411 = smul.addr %s410, 8
          %s412 = scalar_lea.vmem [#allocation8], %s411
          %414 = dma.done %s409, 128
        $region64: #{tpu_custom_call.1} parent=59 // pred_fallthru
          _
      $region60: #{tpu_custom_call.1} parent=5 // pred_fallthru
        _
    $region6: #{tpu_custom_call.1} parent=1 // loop_footer
      %s20 = sadd.s32 1, %s16
    $region7: #{tpu_custom_call.1} parent=1 // loop_footer_branch
      %15 = sbr.rel target = $region3
    $region8: #{tpu_custom_call.1} parent=1 // loop_exit
      _
    %415 = vsyncpa [#allocation3], 1
    %s416 = scalar_lea.sflag [#allocation3], 1
    %417 = vsyncpa %s416, 1
    %418 = vsyncpa [#allocation6], 1
    %419 = vsyncpa [#allocation4], 1
    %s420 = scalar_lea.sflag [#allocation4], 1
    %421 = vsyncpa %s420, 1

</llo_original>
